<compile_context>
chip_gen: v7x
topology: tpu7x:2x2x1
jax: 0.10.0
libtpu: 0.0.40
codegen_flags: <defaults>
</compile_context>

<pallas_src>
import jax
import jax.numpy as jnp
from jax import lax
from jax.experimental import pallas as pl
from jax.experimental.pallas import tpu as pltpu


def _conv_bn_relu_matmul_kernel(cols_ref, w_ref, b_ref, o_ref):
  """One (batch, spatial-tile) step: (outC, CKK) @ (CKK, T) + bias -> ReLU."""
  # Single MXU matmul over the C*K*K contraction; f32 accumulation.
  y = jnp.dot(w_ref[...], cols_ref[0], preferred_element_type=jnp.float32)
  y = y + b_ref[...]                 # (outC, 1) broadcast over the lane dim
  y = jnp.maximum(y, 0.0)            # ReLU
  o_ref[0] = y.astype(o_ref.dtype)   # lane-dense (outC, TILE) store


def _pick_spatial_tile(hw, max_spatial_tile):
  """Largest lane-dense tile: full HW if it fits, else a 128-multiple divisor."""
  if hw % 128 != 0 or hw <= max_spatial_tile:
    return hw
  for cand in (4096, 2048, 1024, 512, 256, 128):
    if cand <= max_spatial_tile and hw % cand == 0:
      return cand
  return hw


def conv2d_basicblock(x, w, gamma, beta, run_mean, run_var, *,
                      ksize, padding=0, dilation=1, eps=1e-5,
                      drop_val=0.0, mxu_dtype=None,
                      max_spatial_tile=2048, vmem_limit_bytes=None):
  """x: (N, inC, H, W) NCHW, w: (outC, inC, K, K). Returns (N, outC, Ho, Wo)."""
  del drop_val  # inference-mode dropout is the identity (see TODO above)

  N, C, H, W = x.shape
  outC = w.shape[0]
  K = ksize
  H_out = H + 2 * padding - dilation * (K - 1)
  W_out = W + 2 * padding - dilation * (K - 1)
  assert H_out > 0 and W_out > 0
  HW = H_out * W_out
  CKK = C * K * K

  # --- Wrapper glue (layout plumbing only, no arithmetic) -------------------
  # Fold eval-mode BatchNorm into the conv weight + a per-channel bias.
  scale = (gamma * lax.rsqrt(run_var + eps)).astype(jnp.float32)       # (outC,)
  w_folded = (w.astype(jnp.float32) * scale[:, None, None, None]
              ).reshape(outC, CKK)                                     # (outC, CKK)
  bias = (beta - run_mean * scale).astype(jnp.float32)[:, None]        # (outC, 1)

  # Spatial zero padding + im2col: (N, C*K*K, H_out*W_out), lane dim = HW.
  x_pad = jnp.pad(x, ((0, 0), (0, 0), (padding, padding), (padding, padding)))
  taps = []
  for kh in range(K):
    for kw in range(K):
      taps.append(lax.slice(
          x_pad,
          (0, 0, kh * dilation, kw * dilation),
          (N, C, kh * dilation + H_out, kw * dilation + W_out)))
  cols = jnp.stack(taps, axis=2)                  # (N, C, K*K, H_out, W_out)
  cols = cols.reshape(N, CKK, HW)                 # matches w_folded's (c, kh, kw) order

  if mxu_dtype is not None:                       # e.g. jnp.bfloat16 on v6e/v7x
    cols = cols.astype(mxu_dtype)
    w_folded = w_folded.astype(mxu_dtype)

  tile = _pick_spatial_tile(HW, max_spatial_tile)
  grid = (N, HW // tile)

  out_flat = pl.pallas_call(
      _conv_bn_relu_matmul_kernel,
      out_shape=jax.ShapeDtypeStruct((N, outC, HW), x.dtype),
      grid_spec=pltpu.PrefetchScalarGridSpec(
          num_scalar_prefetch=0,
          grid=grid,
          in_specs=[
              pl.BlockSpec((1, CKK, tile), lambda n, t: (n, 0, t)),
              pl.BlockSpec((outC, CKK), lambda n, t: (0, 0)),
              pl.BlockSpec((outC, 1), lambda n, t: (0, 0)),
          ],
          out_specs=pl.BlockSpec((1, outC, tile), lambda n, t: (n, 0, t)),
      ),
      compiler_params=pltpu.CompilerParams(
          dimension_semantics=("parallel", "parallel"),
          vmem_limit_bytes=vmem_limit_bytes),
  )(cols, w_folded, bias)

  # Free layout plumbing back to NCHW.
  return out_flat.reshape(N, outC, H_out, W_out)


def _reference(x, w, gamma, beta, run_mean, run_var,
               *, ksize, padding, dilation, eps=1e-5):
  """Pure-JAX reference matching the PyTorch forward (BN in eval mode)."""
  dn = lax.conv_dimension_numbers(x.shape, w.shape, ('NCHW', 'OIHW', 'NCHW'))
  z = lax.conv_general_dilated(
      x, w, window_strides=(1, 1), padding=[(padding, padding)] * 2,
      rhs_dilation=(dilation, dilation), dimension_numbers=dn)
  scale = gamma / jnp.sqrt(run_var + eps)
  shift = beta - run_mean * scale
  y = z * scale[None, :, None, None] + shift[None, :, None, None]
  return jnp.maximum(y, 0.0)


if __name__ == "__main__":
  # Module config: Conv2d_BasicBlock(inC=4, outC=8, ksize=3, padding=1),
  # drop_val=0 -> dropout skipped (as in the PyTorch default).
  N, inC, outC, H, W = 2, 4, 8, 16, 16
  ksize, padding, dilation = 3, 1, 1

  key = jax.random.PRNGKey(0)
  k1, k2, k3, k4, k5, k6 = jax.random.split(key, 6)

  x = jax.random.normal(k1, (N, inC, H, W), dtype=jnp.float32)
  # Conv2d weight, PyTorch shape (outC, inC, K, K), bias=False.
  w = jax.random.normal(k2, (outC, inC, ksize, ksize), dtype=jnp.float32) * 0.2
  # BatchNorm2d parameters / running stats (deterministic, non-trivial).
  gamma = 1.0 + 0.1 * jax.random.normal(k3, (outC,), dtype=jnp.float32)
  beta = 0.1 * jax.random.normal(k4, (outC,), dtype=jnp.float32)
  run_mean = 0.1 * jax.random.normal(k5, (outC,), dtype=jnp.float32)
  run_var = 1.0 + 0.1 * jax.random.uniform(k6, (outC,), dtype=jnp.float32)

  out = conv2d_basicblock(x, w, gamma, beta, run_mean, run_var,
                          ksize=ksize, padding=padding, dilation=dilation)
  out = jax.block_until_ready(out)

  ref = _reference(x, w, gamma, beta, run_mean, run_var,
                   ksize=ksize, padding=padding, dilation=dilation)
  assert out.shape == (N, outC, H, W)
  assert jnp.allclose(out, ref, atol=1e-4, rtol=1e-4), "mismatch vs reference"

  print("KERNEL_OK")
</pallas_src>

<mosaic_0001>
module attributes {stable_mosaic.version = 11 : i64} {
  func.func @_conv_bn_relu_matmul_kernel(%arg0: i32, %arg1: i32, %arg2: memref<1x36x256xf32, #tpu.memory_space<vmem>>, %arg3: memref<8x36xf32, #tpu.memory_space<vmem>>, %arg4: memref<8x1xf32, #tpu.memory_space<vmem>>, %arg5: memref<1x8x256xf32, #tpu.memory_space<vmem>>) attributes {dimension_semantics = [#tpu.dimension_semantics<parallel>, #tpu.dimension_semantics<parallel>], iteration_bounds = array<i64: 2, 1>, scalar_prefetch = 0 : i64, scratch_operands = 0 : i64, tpu.core_type = #tpu.core_type<tc>, window_params = [{transform_indices = @transform_0, window_bounds = array<i64: 1, 36, 256>}, {pipeline_mode = #tpu.pipeline_mode<synchronous>, transform_indices = @transform_1, window_bounds = array<i64: 8, 36>}, {pipeline_mode = #tpu.pipeline_mode<synchronous>, transform_indices = @transform_2, window_bounds = array<i64: 8, 1>}, {transform_indices = @transform_3, window_bounds = array<i64: 1, 8, 256>}]} {
    %c0 = arith.constant 0 : index
    %c0_0 = arith.constant 0 : index
    %0 = vector.load %arg3[%c0, %c0_0] : memref<8x36xf32, #tpu.memory_space<vmem>>, vector<8x36xf32>
    %c0_1 = arith.constant 0 : index
    %c0_2 = arith.constant 0 : index
    %c0_3 = arith.constant 0 : index
    %1 = vector.load %arg2[%c0_1, %c0_2, %c0_3] : memref<1x36x256xf32, #tpu.memory_space<vmem>>, vector<1x36x256xf32>
    %2 = vector.shape_cast %1 : vector<1x36x256xf32> to vector<36x256xf32>
    %cst = arith.constant dense<0.000000e+00> : vector<8x256xf32>
    %3 = tpu.matmul %0, %2, %cst {dimension_numbers = #tpu.dot_dimension_numbers<[1], [0], [0], [1], [0, 0, 1, 1], [], []>} : vector<8x36xf32>, vector<36x256xf32>, vector<8x256xf32> -> vector<8x256xf32>
    %c0_4 = arith.constant 0 : index
    %c0_5 = arith.constant 0 : index
    %4 = vector.load %arg4[%c0_4, %c0_5] : memref<8x1xf32, #tpu.memory_space<vmem>>, vector<8x1xf32>
    %5 = vector.broadcast %4 : vector<8x1xf32> to vector<8x256xf32>
    %6 = arith.addf %3, %5 : vector<8x256xf32>
    %cst_6 = arith.constant 0.000000e+00 : f32
    %7 = vector.broadcast %cst_6 : f32 to vector<8x256xf32>
    %8 = arith.maximumf %6, %7 : vector<8x256xf32>
    %c0_7 = arith.constant 0 : index
    %c0_8 = arith.constant 0 : index
    %c0_9 = arith.constant 0 : index
    %9 = vector.load %arg5[%c0_7, %c0_8, %c0_9] : memref<1x8x256xf32, #tpu.memory_space<vmem>>, vector<1x8x256xf32>
    %10 = vector.shape_cast %9 : vector<1x8x256xf32> to vector<8x256xf32>
    %11 = vector.shape_cast %8 : vector<8x256xf32> to vector<1x8x256xf32>
    tpu.vector_store %arg5[%c0_7, %c0_8, %c0_9], %11 {strides = array<i32>} : memref<1x8x256xf32, #tpu.memory_space<vmem>>, vector<1x8x256xf32>,
    return
  }
  func.func @transform_0(%arg0: i32, %arg1: i32) -> (i32, i32, i32) {
    %c0_i32 = arith.constant 0 : i32
    %c0_i32_0 = arith.constant 0 : i32
    return %arg0, %c0_i32, %arg1 : i32, i32, i32
  }
  func.func @transform_1(%arg0: i32, %arg1: i32) -> (i32, i32) {
    %c0_i32 = arith.constant 0 : i32
    %c0_i32_0 = arith.constant 0 : i32
    %c0_i32_1 = arith.constant 0 : i32
    return %c0_i32, %c0_i32_0 : i32, i32
  }
  func.func @transform_2(%arg0: i32, %arg1: i32) -> (i32, i32) {
    %c0_i32 = arith.constant 0 : i32
    %c0_i32_0 = arith.constant 0 : i32
    %c0_i32_1 = arith.constant 0 : i32
    return %c0_i32, %c0_i32_0 : i32, i32
  }
  func.func @transform_3(%arg0: i32, %arg1: i32) -> (i32, i32, i32) {
    %c0_i32 = arith.constant 0 : i32
    %c0_i32_0 = arith.constant 0 : i32
    return %arg0, %c0_i32, %arg1 : i32, i32, i32
  }
}

</mosaic_0001>

<llo_original>
// kernel: tpu_custom_call.1
$region0: #{tpu_custom_call.1}
  #allocation0 [shape = 'u32[]', space=smem, size = 0x4, offset = 0x4, fixed_abs, tag = 'smem constant byte address 0x4 - core index']
  #allocation1 [shape = 'u32[144,128]{1,0:T(1,128)}', space=vmem, size = 0x12000, scoped, tag = 'internal scratch']
  %s0 = inlined_call_operand.vmem [shape: f32[2,36,256], index: 0, kind: input, shape index: {}]
  %s1 = inlined_call_operand.vmem [shape: f32[8,36], index: 1, kind: input, shape index: {}]
  %s2 = inlined_call_operand.vmem [shape: f32[8,1], index: 2, kind: input, shape index: {}]
  %s3 = inlined_call_operand.hbm [shape: f32[2,8,256], index: 3, kind: output, shape index: {}]
  %s4 = sld [smem:[#allocation0]]
  $region45: #{tpu_custom_call.1} parent=0
    _
  %s6 = ssub.s32 1, %s4
  %s7 = scalar_select 0, %s6, %s4
  $region1: #{tpu_custom_call.1} parent=0
    #allocation2 [shape = 'u8[16384]{0}', space=vmem, size = 0x4000, scoped, tag = 'output window, operand 0']
    #allocation3 [shape = 's32[2]{0}', space=sflag, size = 0x8, scoped, tag = 'scoped memory for tpu_custom_call.1']
    %8 = vsyncpa [#allocation3], 0
    %s9 = scalar_lea.sflag [#allocation3], 1
    %10 = vsyncpa %s9, 0
    loop: start=0, step=1, limit=4
    $region2: #{tpu_custom_call.1} parent=1 // loop_pre_header
      _
    $region3: #{tpu_custom_call.1} parent=1 // loop_header
      %s12 = sphi 0, %s16
      %p13 = scmp.ge.s32.totalorder %s12, 4
      %s19 = sphi 0, %s31
      %s20 = sphi 0, %s27
      %s21 = sphi 0, %s19
      %s22 = sphi 0, %s20
      %s23 = sphi 0, %s21
      %s24 = sphi 0, %s22
      %s36 = sphi 0, %s38
      %s39 = sphi 0, %s36
      %s40 = sphi 0, %s39
      %s56 = sphi 0, %s40
      %s60 = sphi 0, %s60
      %s62 = sphi 0, %s60
      %s63 = sphi 0, %s62
      %s77 = sphi 0, %s63
      %s81 = sphi 0, %s81
      %s83 = sphi 0, %s81
      %s84 = sphi 0, %s83
      %s98 = sphi 0, %s84
      %s106 = sphi 0, %s108
      %s109 = sphi 0, %s106
      %s110 = sphi 0, %s109
      %s126 = sphi 0, %s110
    $region4: #{tpu_custom_call.1} parent=1 // loop_header_branch
      %15 = sbr.rel (%p13) target = $region8
    $region5: #{tpu_custom_call.1} parent=1 // loop_body
      %s17 = ssub.s32 %s12, 1
      %s18 = ssub.s32 %s12, 2
      %s25 = sadd.s32 1, %s20
      %p26 = scmp.ge.s32.totalorder %s25, 1
      %s27 = scalar_select %p26, 0, %s25
      %s28 = sadd.s32 1, %s19
      %s29 = scalar_select %p26, %s28, %s19
      %p30 = scmp.ge.s32.totalorder %s29, 2
      %s31 = scalar_select %p30, 0, %s29
      %s32 = ssub.s32 %s19, %s31
      %s33 = ssub.s32 %s20, %s27
      %s34 = sor.u32 %s32, %s33
      %p35 = scmp.eq.s32.totalorder %s34, 0
      %s37 = sadd.s32 %s36, 1
      %s38 = scalar_select %p35, %s36, %s37
      %p41 = pneg %p35
      %p42 = scmp.eq.s32.totalorder %s12, 1
      %p43 = por %p41, %p42
      %p44 = scmp.ne.s32.totalorder %s36, %s39
      %p45 = scmp.eq.s32.totalorder %s12, 0
      %p46 = por %p44, %p45
      %p47 = scmp.ne.s32.totalorder %s36, %s39
      %p48 = scmp.eq.s32.totalorder %s17, 1
      %p49 = por %p47, %p48
      %p50 = scmp.ne.s32.totalorder %s39, %s40
      %p51 = scmp.eq.s32.totalorder %s17, 0
      %p52 = por %p50, %p51
      %p53 = scmp.ne.s32.totalorder %s39, %s40
      %p54 = scmp.eq.s32.totalorder %s18, 1
      %p55 = por %p53, %p54
      %p57 = scmp.ne.s32.totalorder %s40, %s56
      %p58 = scmp.eq.s32.totalorder %s18, 0
      %p59 = por %p57, %p58
      %s61 = sadd.s32 %s60, 1
      %p64 = scmp.eq.s32.totalorder %s12, 1
      %p65 = scmp.ne.s32.totalorder %s60, %s62
      %p66 = scmp.eq.s32.totalorder %s12, 0
      %p67 = por %p65, %p66
      %p68 = scmp.ne.s32.totalorder %s60, %s62
      %p69 = scmp.eq.s32.totalorder %s17, 1
      %p70 = por %p68, %p69
      %p71 = scmp.ne.s32.totalorder %s62, %s63
      %p72 = scmp.eq.s32.totalorder %s17, 0
      %p73 = por %p71, %p72
      %p74 = scmp.ne.s32.totalorder %s62, %s63
      %p75 = scmp.eq.s32.totalorder %s18, 1
      %p76 = por %p74, %p75
      %p78 = scmp.ne.s32.totalorder %s63, %s77
      %p79 = scmp.eq.s32.totalorder %s18, 0
      %p80 = por %p78, %p79
      %s82 = sadd.s32 %s81, 1
      %p85 = scmp.eq.s32.totalorder %s12, 1
      %p86 = scmp.ne.s32.totalorder %s81, %s83
      %p87 = scmp.eq.s32.totalorder %s12, 0
      %p88 = por %p86, %p87
      %p89 = scmp.ne.s32.totalorder %s81, %s83
      %p90 = scmp.eq.s32.totalorder %s17, 1
      %p91 = por %p89, %p90
      %p92 = scmp.ne.s32.totalorder %s83, %s84
      %p93 = scmp.eq.s32.totalorder %s17, 0
      %p94 = por %p92, %p93
      %p95 = scmp.ne.s32.totalorder %s83, %s84
      %p96 = scmp.eq.s32.totalorder %s18, 1
      %p97 = por %p95, %p96
      %p99 = scmp.ne.s32.totalorder %s84, %s98
      %p100 = scmp.eq.s32.totalorder %s18, 0
      %p101 = por %p99, %p100
      %s102 = ssub.s32 %s19, %s31
      %s103 = ssub.s32 %s20, %s27
      %s104 = sor.u32 %s102, %s103
      %p105 = scmp.eq.s32.totalorder %s104, 0
      %s107 = sadd.s32 %s106, 1
      %s108 = scalar_select %p105, %s106, %s107
      %p111 = pneg %p105
      %p112 = scmp.eq.s32.totalorder %s12, 1
      %p113 = por %p111, %p112
      %p114 = scmp.ne.s32.totalorder %s106, %s109
      %p115 = scmp.eq.s32.totalorder %s12, 0
      %p116 = por %p114, %p115
      %p117 = scmp.ne.s32.totalorder %s106, %s109
      %p118 = scmp.eq.s32.totalorder %s17, 1
      %p119 = por %p117, %p118
      %p120 = scmp.ne.s32.totalorder %s109, %s110
      %p121 = scmp.eq.s32.totalorder %s17, 0
      %p122 = por %p120, %p121
      %p123 = scmp.ne.s32.totalorder %s109, %s110
      %p124 = scmp.eq.s32.totalorder %s18, 1
      %p125 = por %p123, %p124
      %p127 = scmp.ne.s32.totalorder %s110, %s126
      %p128 = scmp.eq.s32.totalorder %s18, 0
      %p129 = por %p127, %p128
      %p130 = scmp.le.s32.totalorder 1, %s12
      %p131 = scmp.lt.s32.totalorder %s12, 3
      %p132 = pnand %p130, %p131
      %p133 = pneg %p132
      // Predicated region
      $region9: #{tpu_custom_call.1} parent=5 // pred_check
        _
      $region10: #{tpu_custom_call.1} parent=5 // pred_check_branch
        %135 = sbr.rel (%p132) target = $region12
      $region11: #{tpu_custom_call.1} parent=5 // pred_region
        %s136 = ssub.s32 %s12, 1
        // Predicated region
        $region13: #{tpu_custom_call.1} parent=11 // pred_check
          %p137 = pneg %p73
        $region14: #{tpu_custom_call.1} parent=11 // pred_check_branch
          %139 = sbr.rel (%p137) target = $region16
        $region15: #{tpu_custom_call.1} parent=11 // pred_region
          _
        $region16: #{tpu_custom_call.1} parent=11 // pred_fallthru
          _
        // Predicated region
        $region17: #{tpu_custom_call.1} parent=11 // pred_check
          %p140 = pneg %p94
        $region18: #{tpu_custom_call.1} parent=11 // pred_check_branch
          %142 = sbr.rel (%p140) target = $region20
        $region19: #{tpu_custom_call.1} parent=11 // pred_region
          _
        $region20: #{tpu_custom_call.1} parent=11 // pred_fallthru
          _
      $region12: #{tpu_custom_call.1} parent=5 // pred_fallthru
        _
      %p143 = scmp.lt.s32.totalorder %s12, 2
      // Predicated region
      $region21: #{tpu_custom_call.1} parent=5 // pred_check
        %p144 = pneg %p143
      $region22: #{tpu_custom_call.1} parent=5 // pred_check_branch
        %146 = sbr.rel (%p144) target = $region24
      $region23: #{tpu_custom_call.1} parent=5 // pred_region
        // Predicated region
        $region25: #{tpu_custom_call.1} parent=23 // pred_check
          %p147 = pneg %p46
        $region26: #{tpu_custom_call.1} parent=23 // pred_check_branch
          %149 = sbr.rel (%p147) target = $region28
        $region27: #{tpu_custom_call.1} parent=23 // pred_region
          %s150 = smul.u32 2, %s20
          %p151 = scmp.lt.s32.totalorder %s19, 1
          %s152 = scalar_select %p151, %s19, 1
          %p153 = scmp.lt.s32.totalorder %s150, 1
          %s154 = scalar_select %p153, %s150, 1
          %s155 = smul.addr %s152, 10
          %s156 = sadd.s32 %s154, %s155
          %s157 = smul.addr %s156, 8
          %s158 = scalar_lea.vmem %s0, %s157
          %s159 = smul.u32 2, %s20
        $region28: #{tpu_custom_call.1} parent=23 // pred_fallthru
          _
      $region24: #{tpu_custom_call.1} parent=5 // pred_fallthru
        _
      %p160 = scmp.le.s32.totalorder 1, %s12
      %p161 = scmp.lt.s32.totalorder %s12, 3
      %p162 = pnand %p160, %p161
      %p163 = pneg %p162
      // Predicated region
      $region29: #{tpu_custom_call.1} parent=5 // pred_check
        _
      $region30: #{tpu_custom_call.1} parent=5 // pred_check_branch
        %165 = sbr.rel (%p162) target = $region32
      $region31: #{tpu_custom_call.1} parent=5 // pred_region
        %s166 = ssub.s32 %s12, 1
        %s167 = smul.u32 2, %s22
        %p168 = scmp.lt.s32.totalorder %s21, 1
        %s169 = scalar_select %p168, %s21, 1
        %p170 = scmp.lt.s32.totalorder %s167, 1
        %s171 = scalar_select %p170, %s167, 1
        %s172 = smul.addr %s169, 10
        %s173 = sadd.s32 %s171, %s172
        %s174 = smul.addr %s173, 8
        %s175 = scalar_lea.vmem %s0, %s174
        %p176 = pneg %p52
        %p177 = pneg %p49
        %p178 = pneg %p73
        %p179 = pneg %p70
        %p180 = pneg %p94
        %p181 = pneg %p91
        %p182 = pneg %p122
        %p183 = pneg %p119
        %s184 = sand.u32 %s109, 1
        %s185 = scalar_lea.sflag [#allocation3], %s184
        %s186 = sand.u32 %s109, 1
        %s187 = smul.addr %s186, 16
        %s188 = scalar_lea.vmem [#allocation2], %s187
        %s189 = smul.u32 2, %s22
        %p190 = scmp.lt.s32.totalorder %s21, 1
        %s191 = scalar_select %p190, %s21, 1
        %p192 = scmp.lt.s32.totalorder %s189, 1
        %s193 = scalar_select %p192, %s189, 1
        %s194 = smul.addr %s191, 10
        %s195 = sadd.s32 %s193, %s194
        %s196 = smul.addr %s195, 8
        %s197 = scalar_lea.vmem %s0, %s196
        %s198 = smul.u32 2, %s22
        %s199 = smul.u32 2, %s22
        %v200 = vld [vmem:[%s1] sm:$0xff]
        %v201 = vld [vmem:[%s197] sm:$0xff]
        %v202 = vld [vmem:[%s197 + $0x8] sm:$0xff]
        %v203 = vld [vmem:[%s197 + $0x10] sm:$0xff]
        %v204 = vld [vmem:[%s197 + $0x18] sm:$0xff]
        %v205 = vld [vmem:[%s197 + $0x20] sm:$0xff]
        %v206 = vld [vmem:[%s197 + $0x28] sm:$0xff]
        %v207 = vld [vmem:[%s197 + $0x30] sm:$0xff]
        %v208 = vld [vmem:[%s197 + $0x38] sm:$0xff]
        %v209 = vld [vmem:[%s197 + $0x40] sm:$0xf]
        %v210 = vld [vmem:[%s197 + $0x48] sm:$0xf]
        %v211 = vld [vmem:[%s2] sm:$0xff]
        %213 = vset.pattern.permute.xlu0 0
        %214 = vperm.xlu0 %213, %v211
        %v215 = vpop.permute.xlu0 %214
        %vm217 = vcmask 293888
        %v219 = vsel %vm217, %v200, 0
        %vm221 = vcmask 1043456
        %v223 = vsel %vm221, %v209, 0
        %v226 = vsel %vm221, %v210, 0
        %228 = vmatprep.subr.mxu0 %v202
        %229 = vmatpush1.msra.mxu0 %v201
        %230 = vmatprep.subr.mxu0 %v204
        %231 = vmatpush1.msra.mxu0 %v203
        %232 = vmatprep.subr.mxu0 %v206
        %233 = vmatpush1.msra.mxu0 %v205
        %234 = vmatprep.subr.mxu0 %v208
        %235 = vmatpush1.msra.mxu0 %v207
        %236 = vmatprep.subr.mxu0 %v226
        %237 = vmatpush1.msra.mxu0 %v223
        %238 = vmatprep.subr.mxu0 0.0
        %239 = vmatpush1.msra.mxu0 0.0
        %240 = vmatprep.subr.mxu0 0.0
        %241 = vmatpush1.msra.mxu0 0.0
        %242 = vmatprep.subr.mxu0 0.0
        %243 = vmatpush1.msra.mxu0 0.0
        %244 = vmatprep.subr.mxu0 0.0
        %245 = vmatpush1.msra.mxu0 0.0
        %246 = vmatprep.subr.mxu0 0.0
        %247 = vmatpush1.msra.mxu0 0.0
        %248 = vmatprep.subr.mxu0 0.0
        %249 = vmatpush1.msra.mxu0 0.0
        %250 = vmatprep.subr.mxu0 0.0
        %251 = vmatpush1.msra.mxu0 0.0
        %252 = vmatprep.subr.mxu0 0.0
        %253 = vmatpush1.msra.mxu0 0.0
        %254 = vmatprep.subr.mxu0 0.0
        %255 = vmatpush1.msra.mxu0 0.0
        %256 = vmatprep.subr.mxu0 0.0
        %257 = vmatpush1.msra.mxu0 0.0
        %258 = vmatprep.subr.mxu0 0.0
        %259 = vmatpush1.msra.mxu0 0.0
        %260 = vmatprep.subr.mxu0 0.0
        %261 = vmatpush1.msra.mxu0 0.0
        %262 = vmatprep.subr.mxu0 0.0
        %263 = vmatpush1.msra.mxu0 0.0
        %264 = vmatprep.subr.mxu0 0.0
        %265 = vmatpush1.msra.mxu0 0.0
        %266 = vmatprep.subr.mxu0 0.0
        %267 = vmatpush1.msra.mxu0 0.0
        %268 = vmatprep.subr.mxu0 0.0
        %269 = vmatpush1.msra.mxu0 0.0
        %270 = vmatprep.subr.mxu0 0.0
        %271 = vmatpush1.msra.mxu0 0.0
        %272 = vmatprep.subr.mxu0 0.0
        %273 = vmatpush1.msra.mxu0 0.0
        %274 = vmatprep.subr.mxu0 0.0
        %275 = vmatpush1.msra.mxu0 0.0
        %276 = vmatprep.subr.mxu0 0.0
        %277 = vmatpush1.msra.mxu0 0.0
        %278 = vmatprep.subr.mxu0 0.0
        %279 = vmatpush1.msra.mxu0 0.0
        %280 = vmatprep.subr.mxu0 0.0
        %281 = vmatpush1.msra.mxu0 0.0
        %282 = vmatprep.subr.mxu0 0.0
        %283 = vmatpush1.msra.mxu0 0.0
        %284 = vmatprep.subr.mxu0 0.0
        %285 = vmatpush1.msra.mxu0 0.0
        %286 = vmatprep.subr.mxu0 0.0
        %287 = vmatpush1.msra.mxu0 0.0
        %288 = vmatprep.subr.mxu0 0.0
        %289 = vmatpush1.msra.mxu0 0.0
        %290 = vmatprep.subr.mxu0 0.0
        %291 = vmatpush1.msra.mxu0 0.0
        %292 = vmatprep.mubr.f32.mxu0 0.0
        %293 = vmatmul.mubr.f32.gmra.mrb[0].mxu0 %v219
        %v294 = vpop.f32.mrb[0].mxu0
        %v295 = vadd.f32 %v215, %v294
        %v296 = vpop.f32.mrb[0].mxu0
        %v297 = vadd.f32 %v215, %v296
        %298 = vdwg.mxu0
        %v299 = vmax.f32 %v295, 0.0
        %v300 = vmax.f32 %v297, 0.0
        %301 = vst [vmem:[%s188] sm:$0xff] %v299
        %302 = vst [vmem:[%s188 + $0x8] sm:$0xff] %v300
        %s303 = sand.u32 %s109, 1
        %s304 = scalar_lea.sflag [#allocation3], %s303
        %s305 = sand.u32 %s109, 1
        %s306 = smul.addr %s305, 16
        %s307 = scalar_lea.vmem [#allocation2], %s306
        // Predicated region
        $region33: #{tpu_custom_call.1} parent=31 // pred_check
          %p308 = pneg %p119
        $region34: #{tpu_custom_call.1} parent=31 // pred_check_branch
          %310 = sbr.rel (%p308) target = $region36
        $region35: #{tpu_custom_call.1} parent=31 // pred_region
          %s311 = smul.u32 2, %s22
          %s313 = ssub.s32 256, 256
          %314 = vsyncadd %s304, %s313
          %s315 = smul.addr %s21, 2
          %s316 = sadd.s32 %s311, %s315
          %s317 = smul.addr %s316, 128
          %s318 = scalar_lea.hbm %s3, %s317
          %s320 = sshll.u32 %s307, 4
          %s321 = int_to_ptr.vmem [resolvable:$true] %s320
          %323 = dma.vmem_to_hbm [thread:$0]  %s321, 256, %s318, %s304
        $region36: #{tpu_custom_call.1} parent=31 // pred_fallthru
          _
      $region32: #{tpu_custom_call.1} parent=5 // pred_fallthru
        _
      %p324 = scmp.le.s32.totalorder 2, %s12
      // Predicated region
      $region37: #{tpu_custom_call.1} parent=5 // pred_check
        %p325 = pneg %p324
      $region38: #{tpu_custom_call.1} parent=5 // pred_check_branch
        %327 = sbr.rel (%p325) target = $region40
      $region39: #{tpu_custom_call.1} parent=5 // pred_region
        %s328 = ssub.s32 %s12, 2
        // Predicated region
        $region41: #{tpu_custom_call.1} parent=39 // pred_check
          %p329 = pneg %p125
        $region42: #{tpu_custom_call.1} parent=39 // pred_check_branch
          %331 = sbr.rel (%p329) target = $region44
        $region43: #{tpu_custom_call.1} parent=39 // pred_region
          %s332 = sand.u32 %s110, 1
          %s333 = scalar_lea.sflag [#allocation3], %s332
          %s334 = sand.u32 %s110, 1
          %s335 = smul.addr %s334, 16
          %s336 = scalar_lea.vmem [#allocation2], %s335
          %337 = dma.done %s333, 256
        $region44: #{tpu_custom_call.1} parent=39 // pred_fallthru
          _
      $region40: #{tpu_custom_call.1} parent=5 // pred_fallthru
        _
    $region6: #{tpu_custom_call.1} parent=1 // loop_footer
      %s16 = sadd.s32 1, %s12
    $region7: #{tpu_custom_call.1} parent=1 // loop_footer_branch
      %11 = sbr.rel target = $region3
    $region8: #{tpu_custom_call.1} parent=1 // loop_exit
      _
    %338 = vsyncpa [#allocation3], 1
    %s339 = scalar_lea.sflag [#allocation3], 1
    %340 = vsyncpa %s339, 1

</llo_original>
